<compile_context>
chip_gen: v7x
topology: tpu7x:2x2x1
jax: 0.10.0
libtpu: 0.0.40
codegen_flags: <defaults>
</compile_context>

<pallas_src>
from functools import partial

import jax
import jax.numpy as jnp
from jax.experimental import pallas as pl
from jax.experimental.pallas import tpu as pltpu

_MIB = 1 << 20


def _pick_tile(dim, target, align=128):
    """Largest divisor of `dim` that is a multiple of `align` and <= target.

    Falls back to the full dim (a block equal to the array extent is always legal).
    Keeps blocks exact (no partial tiles) and lane/sublane aligned.
    """
    if dim <= target:
        return dim
    cand = (target // align) * align
    while cand >= align:
        if dim % cand == 0:
            return cand
        cand -= align
    return dim


def _vmem_limit(block_bytes):
    """Explicit scoped-VMEM limit: 2x the block footprint, clamped to fit every generation
    (v5e/v6e have 128 MiB physical VMEM, v7x only 64 MiB)."""
    return int(min(40 * _MIB, max(16 * _MIB, 2 * block_bytes)))


# ----------------------------- tiled linear: x @ w + b -----------------------------

def _linear_kernel_fused_k(x_ref, w_ref, b_ref, o_ref):
    # Whole contraction in one block: no accumulator scratch, no init/finalize phases.
    acc = jnp.dot(x_ref[...], w_ref[...], preferred_element_type=jnp.float32)
    o_ref[...] = (acc + b_ref[...].astype(jnp.float32)).astype(o_ref.dtype)


def _linear_kernel_multi_k(x_ref, w_ref, b_ref, o_ref, acc_ref):
    k = pl.program_id(2)
    p = jnp.dot(x_ref[...], w_ref[...], preferred_element_type=jnp.float32)

    @pl.when(k == 0)
    def _():
        acc_ref[...] = p            # direct assign: saves the zero-init store + reload

    @pl.when(k > 0)
    def _():
        acc_ref[...] += p

    @pl.when(k == pl.num_programs(2) - 1)
    def _():
        o_ref[...] = (acc_ref[...] + b_ref[...].astype(jnp.float32)).astype(o_ref.dtype)


def linear_pallas(x, w, b, *, out_dtype=None,
                  tm_target=512, tn_target=1024, tk_target=1024):
    """y = x @ w + b, tiled on the MXU with f32 accumulation."""
    N, C = x.shape
    F = w.shape[1]
    out_dtype = out_dtype or x.dtype
    tm = _pick_tile(N, tm_target)
    tn = _pick_tile(F, tn_target)
    b2 = b.reshape(1, F).astype(jnp.float32)
    in_sz = jnp.dtype(x.dtype).itemsize
    out_sz = jnp.dtype(out_dtype).itemsize

    if C <= tk_target:
        tk = C
        block_bytes = (2 * (tm * tk + tk * tn + tn) * in_sz
                       + 2 * tm * tn * out_sz + tm * tn * 4)
        return pl.pallas_call(
            _linear_kernel_fused_k,
            out_shape=jax.ShapeDtypeStruct((N, F), out_dtype),
            grid=(N // tm, F // tn),
            in_specs=[
                pl.BlockSpec((tm, tk), lambda i, j: (i, 0)),
                pl.BlockSpec((tk, tn), lambda i, j: (0, j)),
                pl.BlockSpec((1, tn), lambda i, j: (0, j)),
            ],
            out_specs=pl.BlockSpec((tm, tn), lambda i, j: (i, j)),
            compiler_params=pltpu.CompilerParams(
                dimension_semantics=("parallel", "parallel"),
                vmem_limit_bytes=_vmem_limit(block_bytes)),
        )(x, w, b2)

    tk = _pick_tile(C, tk_target)
    block_bytes = (2 * (tm * tk + tk * tn + tn) * in_sz
                   + 2 * tm * tn * out_sz + 2 * tm * tn * 4)
    return pl.pallas_call(
        _linear_kernel_multi_k,
        out_shape=jax.ShapeDtypeStruct((N, F), out_dtype),
        grid=(N // tm, F // tn, C // tk),
        in_specs=[
            pl.BlockSpec((tm, tk), lambda i, j, k: (i, k)),
            pl.BlockSpec((tk, tn), lambda i, j, k: (k, j)),
            pl.BlockSpec((1, tn), lambda i, j, k: (0, j)),
        ],
        out_specs=pl.BlockSpec((tm, tn), lambda i, j, k: (i, j)),
        scratch_shapes=[pltpu.VMEM((tm, tn), jnp.float32)],
        compiler_params=pltpu.CompilerParams(
            dimension_semantics=("parallel", "parallel", "arbitrary"),
            vmem_limit_bytes=_vmem_limit(block_bytes)),
    )(x, w, b2)


# ----------------------------- flash attention -----------------------------

def _flash_attn_kernel(scale, hp, hd, tk, s_true, approx_recip,
                       q_ref, k_ref, v_ref, o_ref,
                       qs_sc, m_sc, l_sc, acc_sc):
    ki = pl.program_id(3)

    @pl.when(ki == 0)
    def _():
        # q scaling hoisted out of the inner (ki) loop: computed once per q tile.
        qs_sc[...] = (q_ref[...].astype(jnp.float32) * scale).astype(qs_sc.dtype)
        m_sc[...] = jnp.full(m_sc.shape, -jnp.inf, dtype=m_sc.dtype)
        l_sc[...] = jnp.zeros(l_sc.shape, l_sc.dtype)
        acc_sc[...] = jnp.zeros(acc_sc.shape, acc_sc.dtype)

    q = qs_sc[...]                           # (tq, hp*hd), already scaled
    k = k_ref[...]                           # (tk, hp*hd)
    v = v_ref[...]                           # (tk, hp*hd)

    if s_true is not None:                   # static: only emitted when S was padded
        kpos = ki * tk + jax.lax.broadcasted_iota(jnp.int32, (1, tk), 1)
        kmask = kpos < s_true                # (1, tk)

    for h in range(hp):                      # static unroll over packed heads
        lo = h * hd
        hi = lo + hd
        # scores = q_h @ k_h^T without an explicit transpose: contract over head_dim.
        s = jax.lax.dot_general(
            q[:, lo:hi], k[:, lo:hi],
            dimension_numbers=(((1,), (1,)), ((), ())),
            preferred_element_type=jnp.float32)                  # (tq, tk) f32
        if s_true is not None:
            s = jnp.where(kmask, s, -jnp.inf)

        m_prev = m_sc[h]
        m_new = jnp.maximum(m_prev, jnp.max(s, axis=-1, keepdims=True))
        alpha = jnp.exp(m_prev - m_new)
        p = jnp.exp(s - m_new)                                   # f32 softmax numerator
        l_sc[h] = alpha * l_sc[h] + jnp.sum(p, axis=-1, keepdims=True)
        acc_sc[h] = alpha * acc_sc[h] + jax.lax.dot_general(
            p.astype(v.dtype), v[:, lo:hi],
            dimension_numbers=(((1,), (0,)), ((), ())),
            preferred_element_type=jnp.float32)
        m_sc[h] = m_new

    @pl.when(ki == pl.num_programs(3) - 1)
    def _():
        outs = []
        for h in range(hp):
            inv_l = pl.reciprocal(l_sc[h], approx=approx_recip)  # EUP, exact in f32 path
            outs.append(acc_sc[h] * inv_l)
        o = outs[0] if hp == 1 else jnp.concatenate(outs, axis=-1)
        o_ref[...] = o.astype(o_ref.dtype)


def _heads_per_block(num_heads, head_dim):
    """Pack adjacent heads so the block lane width (hp * head_dim) is a multiple of 128."""
    if head_dim % 128 == 0:
        return 1
    for hp in range(2, num_heads + 1):
        if num_heads % hp == 0 and (hp * head_dim) % 128 == 0:
            return hp
    # TODO(synk): no legal packing (odd head count with small head_dim) -> masked slow path.
    return 1


def flash_attention_pallas(qkv, B, S, num_heads, head_dim, scale, *,
                           out_dtype, s_true=None, tq_target=1024, tk_target=512):
    """qkv: (B*S, 3*C) with channel layout [q|k|v] x [num_heads] x [head_dim].

    Returns (B*S, C) already in the [num_heads, head_dim] channel layout consumed by proj,
    i.e. both surrounding permutes of the PyTorch module are folded into the BlockSpecs.
    `s_true`: real (unpadded) sequence length; when set, padded key columns are masked.
    """
    C = num_heads * head_dim
    hp = _heads_per_block(num_heads, head_dim)
    hpd = hp * head_dim
    n_groups = num_heads // hp
    tq = _pick_tile(S, tq_target)
    tk = _pick_tile(S, tk_target)
    n_q = S // tq
    n_k = S // tk

    q_map = lambda b, g, qi, ki: (b * n_q + qi, g)
    k_map = lambda b, g, qi, ki: (b * n_k + ki, n_groups + g)
    v_map = lambda b, g, qi, ki: (b * n_k + ki, 2 * n_groups + g)
    o_map = lambda b, g, qi, ki: (b * n_q + qi, g)

    in_sz = jnp.dtype(qkv.dtype).itemsize
    out_sz = jnp.dtype(out_dtype).itemsize
    lane_pad = max(head_dim, 128)
    block_bytes = (2 * (tq + 2 * tk) * hpd * in_sz          # q/k/v double-buffered
                   + 2 * tq * hpd * out_sz                   # output double-buffered
                   + tq * hpd * in_sz                         # pre-scaled q scratch
                   + hp * tq * (2 * 128 + lane_pad) * 4)      # m/l/acc scratch (lane-padded)

    approx_recip = jnp.dtype(qkv.dtype) != jnp.dtype(jnp.float32)

    return pl.pallas_call(
        partial(_flash_attn_kernel, scale, hp, head_dim, tk, s_true, approx_recip),
        out_shape=jax.ShapeDtypeStruct((B * S, C), out_dtype),
        grid=(B, n_groups, n_q, n_k),
        in_specs=[
            pl.BlockSpec((tq, hpd), q_map),
            pl.BlockSpec((tk, hpd), k_map),
            pl.BlockSpec((tk, hpd), v_map),
        ],
        out_specs=pl.BlockSpec((tq, hpd), o_map),
        scratch_shapes=[
            pltpu.VMEM((tq, hpd), qkv.dtype),                 # pre-scaled q
            pltpu.VMEM((hp, tq, 1), jnp.float32),             # running max m
            pltpu.VMEM((hp, tq, 1), jnp.float32),             # running denom l
            pltpu.VMEM((hp, tq, head_dim), jnp.float32),      # f32 output accumulator
        ],
        compiler_params=pltpu.CompilerParams(
            dimension_semantics=("parallel", "parallel", "parallel", "arbitrary"),
            vmem_limit_bytes=_vmem_limit(block_bytes)),
    )(qkv, qkv, qkv)


# ----------------------------- Module forward -----------------------------

def attention_forward(x, params, num_heads, *, compute_dtype=jnp.bfloat16):
    """Equivalent of Attention.forward with use_rel_pos=False.

    compute_dtype defaults to bf16 (MXU-native operands, half the HBM traffic); all matmul
    accumulation and softmax statistics remain in f32.
    """
    B, H, W, C = x.shape
    S = H * W
    hd = C // num_heads
    scale = hd ** (-0.5)
    dt = compute_dtype

    # Pad the sequence to a sublane-friendly length (handles windowed S like 14*14=196).
    # Padded key columns are masked inside the attention kernel; padded query rows are dropped.
    S_pad = ((S + 15) // 16) * 16
    x_seq = x.reshape(B, S, C)
    if S_pad != S:
        x_seq = jnp.pad(x_seq, ((0, 0), (0, S_pad - S), (0, 0)))
    x_flat = x_seq.reshape(B * S_pad, C).astype(dt)

    qkv = linear_pallas(x_flat, params["w_qkv"].astype(dt), params["b_qkv"],
                        out_dtype=dt)                                   # (B*S_pad, 3C)

    attn_out = flash_attention_pallas(
        qkv, B, S_pad, num_heads, hd, scale, out_dtype=dt,
        s_true=(S if S_pad != S else None))                             # (B*S_pad, C)

    out = linear_pallas(attn_out, params["w_proj"].astype(dt), params["b_proj"],
                        out_dtype=x.dtype)                              # (B*S_pad, C)
    out = out.reshape(B, S_pad, C)
    if S_pad != S:
        out = out[:, :S, :]
    return out.reshape(B, H, W, C)


# ----------------------------- Pure-JAX reference -----------------------------

def attention_reference(x, params, num_heads):
    B, H, W, C = x.shape
    S = H * W
    hd = C // num_heads
    scale = hd ** (-0.5)
    qkv = x.reshape(B * S, C) @ params["w_qkv"] + params["b_qkv"]
    qkv = (qkv.reshape(B, S, 3, num_heads, hd)
              .transpose(2, 0, 3, 1, 4)
              .reshape(3, B * num_heads, S, hd))
    q, k, v = qkv[0], qkv[1], qkv[2]
    attn = jax.nn.softmax(jnp.einsum("bqd,bkd->bqk", q * scale, k), axis=-1)
    o = jnp.einsum("bqk,bkd->bqd", attn, v)
    o = (o.reshape(B, num_heads, H, W, hd)
          .transpose(0, 2, 3, 1, 4)
          .reshape(B * S, C))
    return (o @ params["w_proj"] + params["b_proj"]).reshape(B, H, W, C)


# ----------------------------- Main -----------------------------

if __name__ == "__main__":
    key = jax.random.PRNGKey(0)

    def make_case(case_key, B, H, W, dim):
        kx, k1, k2, k3, k4 = jax.random.split(case_key, 5)
        x = jax.random.normal(kx, (B, H, W, dim), dtype=jnp.float32)
        params = {
            "w_qkv": 0.02 * jax.random.normal(k1, (dim, 3 * dim), dtype=jnp.float32),
            "b_qkv": 0.02 * jax.random.normal(k2, (3 * dim,), dtype=jnp.float32),
            "w_proj": 0.02 * jax.random.normal(k3, (dim, dim), dtype=jnp.float32),
            "b_proj": 0.02 * jax.random.normal(k4, (dim,), dtype=jnp.float32),
        }
        return x, params

    key1, key2 = jax.random.split(key)

    # Case 1: head_dim = 128 (lane-dense without packing), S = 64 (aligned).
    B, H, W, dim, heads = 2, 8, 8, 256, 2
    x, params = make_case(key1, B, H, W, dim)
    ref = attention_reference(x, params, heads)

    out_f32 = jax.block_until_ready(
        attention_forward(x, params, heads, compute_dtype=jnp.float32))
    assert out_f32.shape == (B, H, W, dim)
    assert jnp.allclose(out_f32, ref, rtol=5e-3, atol=5e-3), "case1 f32 mismatch vs reference"

    out_bf16 = jax.block_until_ready(attention_forward(x, params, heads))   # bf16 default
    assert out_bf16.shape == (B, H, W, dim)
    assert jnp.allclose(out_bf16, ref, rtol=5e-2, atol=2e-2), "case1 bf16 mismatch vs reference"

    # Case 2: head_dim = 64 (2-heads-per-block packing) and ragged S = 7*7 = 49 (padding + key mask).
    B, H, W, dim, heads = 2, 7, 7, 128, 2
    x, params = make_case(key2, B, H, W, dim)
    ref = attention_reference(x, params, heads)

    out_f32 = jax.block_until_ready(
        attention_forward(x, params, heads, compute_dtype=jnp.float32))
    assert out_f32.shape == (B, H, W, dim)
    assert jnp.allclose(out_f32, ref, rtol=5e-3, atol=5e-3), "case2 f32 mismatch vs reference"

    out_bf16 = jax.block_until_ready(attention_forward(x, params, heads))
    assert out_bf16.shape == (B, H, W, dim)
    assert jnp.allclose(out_bf16, ref, rtol=5e-2, atol=2e-2), "case2 bf16 mismatch vs reference"

    print("KERNEL_OK")
</pallas_src>

<mosaic_0001>
module attributes {stable_mosaic.version = 11 : i64} {
  func.func @_linear_kernel_fused_k(%arg0: i32, %arg1: i32, %arg2: memref<128x256xf32, #tpu.memory_space<vmem>>, %arg3: memref<256x768xf32, #tpu.memory_space<vmem>>, %arg4: memref<1x768xf32, #tpu.memory_space<vmem>>, %arg5: memref<128x768xf32, #tpu.memory_space<vmem>>) attributes {dimension_semantics = [#tpu.dimension_semantics<parallel>, #tpu.dimension_semantics<parallel>], iteration_bounds = array<i64: 1, 1>, scalar_prefetch = 0 : i64, scratch_operands = 0 : i64, tpu.core_type = #tpu.core_type<tc>, window_params = [{transform_indices = @transform_0, window_bounds = array<i64: 128, 256>}, {transform_indices = @transform_1, window_bounds = array<i64: 256, 768>}, {transform_indices = @transform_2, window_bounds = array<i64: 1, 768>}, {transform_indices = @transform_3, window_bounds = array<i64: 128, 768>}]} {
    %c0 = arith.constant 0 : index
    %c0_0 = arith.constant 0 : index
    %0 = vector.load %arg2[%c0, %c0_0] : memref<128x256xf32, #tpu.memory_space<vmem>>, vector<128x256xf32>
    %c0_1 = arith.constant 0 : index
    %c0_2 = arith.constant 0 : index
    %1 = vector.load %arg3[%c0_1, %c0_2] : memref<256x768xf32, #tpu.memory_space<vmem>>, vector<256x768xf32>
    %cst = arith.constant dense<0.000000e+00> : vector<128x768xf32>
    %2 = tpu.matmul %0, %1, %cst {dimension_numbers = #tpu.dot_dimension_numbers<[1], [0], [0], [1], [0, 0, 1, 1], [], []>} : vector<128x256xf32>, vector<256x768xf32>, vector<128x768xf32> -> vector<128x768xf32>
    %c0_3 = arith.constant 0 : index
    %c0_4 = arith.constant 0 : index
    %3 = vector.load %arg4[%c0_3, %c0_4] : memref<1x768xf32, #tpu.memory_space<vmem>>, vector<1x768xf32>
    %4 = vector.broadcast %3 : vector<1x768xf32> to vector<128x768xf32>
    %5 = arith.addf %2, %4 : vector<128x768xf32>
    %c0_5 = arith.constant 0 : index
    %c0_6 = arith.constant 0 : index
    %6 = vector.load %arg5[%c0_5, %c0_6] : memref<128x768xf32, #tpu.memory_space<vmem>>, vector<128x768xf32>
    tpu.vector_store %arg5[%c0_5, %c0_6], %5 {strides = array<i32>} : memref<128x768xf32, #tpu.memory_space<vmem>>, vector<128x768xf32>,
    return
  }
  func.func @transform_0(%arg0: i32, %arg1: i32) -> (i32, i32) {
    %c0_i32 = arith.constant 0 : i32
    %c0_i32_0 = arith.constant 0 : i32
    return %arg0, %c0_i32 : i32, i32
  }
  func.func @transform_1(%arg0: i32, %arg1: i32) -> (i32, i32) {
    %c0_i32 = arith.constant 0 : i32
    %c0_i32_0 = arith.constant 0 : i32
    return %c0_i32, %arg1 : i32, i32
  }
  func.func @transform_2(%arg0: i32, %arg1: i32) -> (i32, i32) {
    %c0_i32 = arith.constant 0 : i32
    %c0_i32_0 = arith.constant 0 : i32
    return %c0_i32, %arg1 : i32, i32
  }
  func.func @transform_3(%arg0: i32, %arg1: i32) -> (i32, i32) {
    %c0_i32 = arith.constant 0 : i32
    return %arg0, %arg1 : i32, i32
  }
}

</mosaic_0001>

<llo_original>
// kernel: tpu_custom_call.1
$region0: #{tpu_custom_call.1}
  #allocation0 [shape = 'u32[]', space=smem, size = 0x4, offset = 0x4, fixed_abs, tag = 'smem constant byte address 0x4 - core index']
  #allocation1 [shape = 'u32[144,128]{1,0:T(1,128)}', space=vmem, size = 0x12000, scoped, tag = 'internal scratch']
  %s0 = inlined_call_operand.hbm [shape: f32[128,256], index: 0, kind: input, shape index: {}]
  %s1 = inlined_call_operand.hbm [shape: f32[256,768], index: 1, kind: input, shape index: {}]
  %s2 = inlined_call_operand.vmem [shape: f32[1,768], index: 2, kind: input, shape index: {}]
  %s3 = inlined_call_operand.hbm [shape: f32[128,768], index: 3, kind: output, shape index: {}]
  %s4 = sld [smem:[#allocation0]]
  $region30: #{tpu_custom_call.1} parent=0
    _
  %s6 = ssub.s32 1, %s4
  %s7 = scalar_select 0, %s6, %s4
  $region1: #{tpu_custom_call.1} parent=0
    #allocation2 [shape = 'u8[131072]{0}', space=vmem, size = 0x20000, scoped, tag = 'input window, operand 0, single buffered']
    #allocation3 [shape = 's32[1]{0}', space=sflag, size = 0x4, scoped, tag = 'scoped memory for tpu_custom_call.1']
    #allocation4 [shape = 's32[1]{0}', space=sflag, size = 0x4, scoped, tag = 'scoped memory for tpu_custom_call.1']
    #allocation5 [shape = 'u8[786432]{0}', space=vmem, size = 0xc0000, scoped, tag = 'input window, operand 1, single buffered']
    #allocation6 [shape = 's32[1]{0}', space=sflag, size = 0x4, scoped, tag = 'scoped memory for tpu_custom_call.1']
    #allocation7 [shape = 'u8[393216]{0}', space=vmem, size = 0x60000, scoped, tag = 'output window, operand 0, single buffered']
    %8 = vsyncpa [#allocation3], 0
    %9 = vsyncpa [#allocation6], 0
    %10 = vsyncpa [#allocation4], 0
    // Predicated region
    $region2: #{tpu_custom_call.1} parent=1 // pred_check
      _
    $region3: #{tpu_custom_call.1} parent=1 // pred_check_branch
      %12 = sbr.rel (0) target = $region5
    $region4: #{tpu_custom_call.1} parent=1 // pred_region
      %s14 = ssub.s32 4096, 4096
      %15 = vsyncadd [#allocation3], %s14
      %s16 = sshll.u32 [#allocation2], 4
      %s17 = int_to_ptr.vmem [resolvable:$true] %s16
      %22 = dma.hbm_to_vmem [thread:$0]  %s0, 4096, %s17, [#allocation3], 256, 256, 16
    $region5: #{tpu_custom_call.1} parent=1 // pred_fallthru
      _
    // Predicated region
    $region6: #{tpu_custom_call.1} parent=1 // pred_check
      _
    $region7: #{tpu_custom_call.1} parent=1 // pred_check_branch
      %24 = sbr.rel (0) target = $region9
    $region8: #{tpu_custom_call.1} parent=1 // pred_region
      %s26 = ssub.s32 24576, 24576
      %27 = vsyncadd [#allocation6], %s26
      %s28 = sshll.u32 [#allocation5], 4
      %s29 = int_to_ptr.vmem [resolvable:$true] %s28
      %34 = dma.hbm_to_vmem [thread:$0]  %s1, 24576, %s29, [#allocation6], 768, 768, 48
    $region9: #{tpu_custom_call.1} parent=1 // pred_fallthru
      _
    // Predicated region
    $region10: #{tpu_custom_call.1} parent=1 // pred_check
      _
    $region11: #{tpu_custom_call.1} parent=1 // pred_check_branch
      %36 = sbr.rel (0) target = $region13
    $region12: #{tpu_custom_call.1} parent=1 // pred_region
      _
    $region13: #{tpu_custom_call.1} parent=1 // pred_fallthru
      _
    // Predicated region
    $region14: #{tpu_custom_call.1} parent=1 // pred_check
      _
    $region15: #{tpu_custom_call.1} parent=1 // pred_check_branch
      %38 = sbr.rel (0) target = $region17
    $region16: #{tpu_custom_call.1} parent=1 // pred_region
      %39 = dma.done [#allocation3], 4096
    $region17: #{tpu_custom_call.1} parent=1 // pred_fallthru
      _
    // Predicated region
    $region18: #{tpu_custom_call.1} parent=1 // pred_check
      _
    $region19: #{tpu_custom_call.1} parent=1 // pred_check_branch
      %41 = sbr.rel (0) target = $region21
    $region20: #{tpu_custom_call.1} parent=1 // pred_region
      %42 = dma.done [#allocation6], 24576
    $region21: #{tpu_custom_call.1} parent=1 // pred_fallthru
      _
    %v43 = vld [vmem:[#allocation2] sm:$0xff]
    %v44 = vld [vmem:[#allocation2 + $0x8] sm:$0xff]
    %v45 = vld [vmem:[#allocation2 + $0x10] sm:$0xff]
    %v46 = vld [vmem:[#allocation2 + $0x18] sm:$0xff]
    %v47 = vld [vmem:[#allocation2 + $0x20] sm:$0xff]
    %v48 = vld [vmem:[#allocation2 + $0x28] sm:$0xff]
    %v49 = vld [vmem:[#allocation2 + $0x30] sm:$0xff]
    %v50 = vld [vmem:[#allocation2 + $0x38] sm:$0xff]
    %v51 = vld [vmem:[#allocation2 + $0x40] sm:$0xff]
    %v52 = vld [vmem:[#allocation2 + $0x48] sm:$0xff]
    %v53 = vld [vmem:[#allocation2 + $0x50] sm:$0xff]
    %v54 = vld [vmem:[#allocation2 + $0x58] sm:$0xff]
    %v55 = vld [vmem:[#allocation2 + $0x60] sm:$0xff]
    %v56 = vld [vmem:[#allocation2 + $0x68] sm:$0xff]
    %v57 = vld [vmem:[#allocation2 + $0x70] sm:$0xff]
    %v58 = vld [vmem:[#allocation2 + $0x78] sm:$0xff]
    %v59 = vld [vmem:[#allocation2 + $0x80] sm:$0xff]
    %v60 = vld [vmem:[#allocation2 + $0x88] sm:$0xff]
    %v61 = vld [vmem:[#allocation2 + $0x90] sm:$0xff]
    %v62 = vld [vmem:[#allocation2 + $0x98] sm:$0xff]
    %v63 = vld [vmem:[#allocation2 + $0xa0] sm:$0xff]
    %v64 = vld [vmem:[#allocation2 + $0xa8] sm:$0xff]
    %v65 = vld [vmem:[#allocation2 + $0xb0] sm:$0xff]
    %v66 = vld [vmem:[#allocation2 + $0xb8] sm:$0xff]
    %v67 = vld [vmem:[#allocation2 + $0xc0] sm:$0xff]
    %v68 = vld [vmem:[#allocation2 + $0xc8] sm:$0xff]
    %v69 = vld [vmem:[#allocation2 + $0xd0] sm:$0xff]
    %v70 = vld [vmem:[#allocation2 + $0xd8] sm:$0xff]
    %v71 = vld [vmem:[#allocation2 + $0xe0] sm:$0xff]
    %v72 = vld [vmem:[#allocation2 + $0xe8] sm:$0xff]
    %v73 = vld [vmem:[#allocation2 + $0xf0] sm:$0xff]
    %v74 = vld [vmem:[#allocation2 + $0xf8] sm:$0xff]
    %v75 = vld [vmem:[#allocation5] sm:$0xff]
    %v76 = vld [vmem:[#allocation5 + $0x8] sm:$0xff]
    %v77 = vld [vmem:[#allocation5 + $0x10] sm:$0xff]
    %v78 = vld [vmem:[#allocation5 + $0x18] sm:$0xff]
    %v79 = vld [vmem:[#allocation5 + $0x20] sm:$0xff]
    %v80 = vld [vmem:[#allocation5 + $0x28] sm:$0xff]
    %v81 = vld [vmem:[#allocation5 + $0x30] sm:$0xff]
    %v82 = vld [vmem:[#allocation5 + $0x38] sm:$0xff]
    %v83 = vld [vmem:[#allocation5 + $0x40] sm:$0xff]
    %v84 = vld [vmem:[#allocation5 + $0x48] sm:$0xff]
    %v85 = vld [vmem:[#allocation5 + $0x50] sm:$0xff]
    %v86 = vld [vmem:[#allocation5 + $0x58] sm:$0xff]
    %v87 = vld [vmem:[#allocation5 + $0x60] sm:$0xff]
    %v88 = vld [vmem:[#allocation5 + $0x68] sm:$0xff]
    %v89 = vld [vmem:[#allocation5 + $0x70] sm:$0xff]
    %v90 = vld [vmem:[#allocation5 + $0x78] sm:$0xff]
    %v91 = vld [vmem:[#allocation5 + $0x80] sm:$0xff]
    %v92 = vld [vmem:[#allocation5 + $0x88] sm:$0xff]
    %v93 = vld [vmem:[#allocation5 + $0x90] sm:$0xff]
    %v94 = vld [vmem:[#allocation5 + $0x98] sm:$0xff]
    %v95 = vld [vmem:[#allocation5 + $0xa0] sm:$0xff]
    %v96 = vld [vmem:[#allocation5 + $0xa8] sm:$0xff]
    %v97 = vld [vmem:[#allocation5 + $0xb0] sm:$0xff]
    %v98 = vld [vmem:[#allocation5 + $0xb8] sm:$0xff]
    %v99 = vld [vmem:[#allocation5 + $0xc0] sm:$0xff]
    %v100 = vld [vmem:[#allocation5 + $0xc8] sm:$0xff]
    %v101 = vld [vmem:[#allocation5 + $0xd0] sm:$0xff]
    %v102 = vld [vmem:[#allocation5 + $0xd8] sm:$0xff]
    %v103 = vld [vmem:[#allocation5 + $0xe0] sm:$0xff]
    %v104 = vld [vmem:[#allocation5 + $0xe8] sm:$0xff]
    %v105 = vld [vmem:[#allocation5 + $0xf0] sm:$0xff]
    %v106 = vld [vmem:[#allocation5 + $0xf8] sm:$0xff]
    %v107 = vld [vmem:[#allocation5 + $0x100] sm:$0xff]
    %v108 = vld [vmem:[#allocation5 + $0x108] sm:$0xff]
    %v109 = vld [vmem:[#allocation5 + $0x110] sm:$0xff]
    %v110 = vld [vmem:[#allocation5 + $0x118] sm:$0xff]
    %v111 = vld [vmem:[#allocation5 + $0x120] sm:$0xff]
    %v112 = vld [vmem:[#allocation5 + $0x128] sm:$0xff]
    %v113 = vld [vmem:[#allocation5 + $0x130] sm:$0xff]
    %v114 = vld [vmem:[#allocation5 + $0x138] sm:$0xff]
    %v115 = vld [vmem:[#allocation5 + $0x140] sm:$0xff]
    %v116 = vld [vmem:[#allocation5 + $0x148] sm:$0xff]
    %v117 = vld [vmem:[#allocation5 + $0x150] sm:$0xff]
    %v118 = vld [vmem:[#allocation5 + $0x158] sm:$0xff]
    %v119 = vld [vmem:[#allocation5 + $0x160] sm:$0xff]
    %v120 = vld [vmem:[#allocation5 + $0x168] sm:$0xff]
    %v121 = vld [vmem:[#allocation5 + $0x170] sm:$0xff]
    %v122 = vld [vmem:[#allocation5 + $0x178] sm:$0xff]
    %v123 = vld [vmem:[#allocation5 + $0x180] sm:$0xff]
    %v124 = vld [vmem:[#allocation5 + $0x188] sm:$0xff]
    %v125 = vld [vmem:[#allocation5 + $0x190] sm:$0xff]
    %v126 = vld [vmem:[#allocation5 + $0x198] sm:$0xff]
    %v127 = vld [vmem:[#allocation5 + $0x1a0] sm:$0xff]
    %v128 = vld [vmem:[#allocation5 + $0x1a8] sm:$0xff]
    %v129 = vld [vmem:[#allocation5 + $0x1b0] sm:$0xff]
    %v130 = vld [vmem:[#allocation5 + $0x1b8] sm:$0xff]
    %v131 = vld [vmem:[#allocation5 + $0x1c0] sm:$0xff]
    %v132 = vld [vmem:[#allocation5 + $0x1c8] sm:$0xff]
    %v133 = vld [vmem:[#allocation5 + $0x1d0] sm:$0xff]
    %v134 = vld [vmem:[#allocation5 + $0x1d8] sm:$0xff]
    %v135 = vld [vmem:[#allocation5 + $0x1e0] sm:$0xff]
    %v136 = vld [vmem:[#allocation5 + $0x1e8] sm:$0xff]
    %v137 = vld [vmem:[#allocation5 + $0x1f0] sm:$0xff]
    %v138 = vld [vmem:[#allocation5 + $0x1f8] sm:$0xff]
    %v139 = vld [vmem:[#allocation5 + $0x200] sm:$0xff]
    %v140 = vld [vmem:[#allocation5 + $0x208] sm:$0xff]
    %v141 = vld [vmem:[#allocation5 + $0x210] sm:$0xff]
    %v142 = vld [vmem:[#allocation5 + $0x218] sm:$0xff]
    %v143 = vld [vmem:[#allocation5 + $0x220] sm:$0xff]
    %v144 = vld [vmem:[#allocation5 + $0x228] sm:$0xff]
    %v145 = vld [vmem:[#allocation5 + $0x230] sm:$0xff]
    %v146 = vld [vmem:[#allocation5 + $0x238] sm:$0xff]
    %v147 = vld [vmem:[#allocation5 + $0x240] sm:$0xff]
    %v148 = vld [vmem:[#allocation5 + $0x248] sm:$0xff]
    %v149 = vld [vmem:[#allocation5 + $0x250] sm:$0xff]
    %v150 = vld [vmem:[#allocation5 + $0x258] sm:$0xff]
    %v151 = vld [vmem:[#allocation5 + $0x260] sm:$0xff]
    %v152 = vld [vmem:[#allocation5 + $0x268] sm:$0xff]
    %v153 = vld [vmem:[#allocation5 + $0x270] sm:$0xff]
    %v154 = vld [vmem:[#allocation5 + $0x278] sm:$0xff]
    %v155 = vld [vmem:[#allocation5 + $0x280] sm:$0xff]
    %v156 = vld [vmem:[#allocation5 + $0x288] sm:$0xff]
    %v157 = vld [vmem:[#allocation5 + $0x290] sm:$0xff]
    %v158 = vld [vmem:[#allocation5 + $0x298] sm:$0xff]
    %v159 = vld [vmem:[#allocation5 + $0x2a0] sm:$0xff]
    %v160 = vld [vmem:[#allocation5 + $0x2a8] sm:$0xff]
    %v161 = vld [vmem:[#allocation5 + $0x2b0] sm:$0xff]
    %v162 = vld [vmem:[#allocation5 + $0x2b8] sm:$0xff]
    %v163 = vld [vmem:[#allocation5 + $0x2c0] sm:$0xff]
    %v164 = vld [vmem:[#allocation5 + $0x2c8] sm:$0xff]
    %v165 = vld [vmem:[#allocation5 + $0x2d0] sm:$0xff]
    %v166 = vld [vmem:[#allocation5 + $0x2d8] sm:$0xff]
    %v167 = vld [vmem:[#allocation5 + $0x2e0] sm:$0xff]
    %v168 = vld [vmem:[#allocation5 + $0x2e8] sm:$0xff]
    %v169 = vld [vmem:[#allocation5 + $0x2f0] sm:$0xff]
    %v170 = vld [vmem:[#allocation5 + $0x2f8] sm:$0xff]
    %v171 = vld [vmem:[#allocation5 + $0x300] sm:$0xff]
    %v172 = vld [vmem:[#allocation5 + $0x308] sm:$0xff]
    %v173 = vld [vmem:[#allocation5 + $0x310] sm:$0xff]
    %v174 = vld [vmem:[#allocation5 + $0x318] sm:$0xff]
    %v175 = vld [vmem:[#allocation5 + $0x320] sm:$0xff]
    %v176 = vld [vmem:[#allocation5 + $0x328] sm:$0xff]
    %v177 = vld [vmem:[#allocation5 + $0x330] sm:$0xff]
    %v178 = vld [vmem:[#allocation5 + $0x338] sm:$0xff]
    %v179 = vld [vmem:[#allocation5 + $0x340] sm:$0xff]
    %v180 = vld [vmem:[#allocation5 + $0x348] sm:$0xff]
    %v181 = vld [vmem:[#allocation5 + $0x350] sm:$0xff]
    %v182 = vld [vmem:[#allocation5 + $0x358] sm:$0xff]
    %v183 = vld [vmem:[#allocation5 + $0x360] sm:$0xff]
    %v184 = vld [vmem:[#allocation5 + $0x368] sm:$0xff]
    %v185 = vld [vmem:[#allocation5 + $0x370] sm:$0xff]
    %v186 = vld [vmem:[#allocation5 + $0x378] sm:$0xff]
    %v187 = vld [vmem:[#allocation5 + $0x380] sm:$0xff]
    %v188 = vld [vmem:[#allocation5 + $0x388] sm:$0xff]
    %v189 = vld [vmem:[#allocation5 + $0x390] sm:$0xff]
    %v190 = vld [vmem:[#allocation5 + $0x398] sm:$0xff]
    %v191 = vld [vmem:[#allocation5 + $0x3a0] sm:$0xff]
    %v192 = vld [vmem:[#allocation5 + $0x3a8] sm:$0xff]
    %v193 = vld [vmem:[#allocation5 + $0x3b0] sm:$0xff]
    %v194 = vld [vmem:[#allocation5 + $0x3b8] sm:$0xff]
    %v195 = vld [vmem:[#allocation5 + $0x3c0] sm:$0xff]
    %v196 = vld [vmem:[#allocation5 + $0x3c8] sm:$0xff]
    %v197 = vld [vmem:[#allocation5 + $0x3d0] sm:$0xff]
    %v198 = vld [vmem:[#allocation5 + $0x3d8] sm:$0xff]
    %v199 = vld [vmem:[#allocation5 + $0x3e0] sm:$0xff]
    %v200 = vld [vmem:[#allocation5 + $0x3e8] sm:$0xff]
    %v201 = vld [vmem:[#allocation5 + $0x3f0] sm:$0xff]
    %v202 = vld [vmem:[#allocation5 + $0x3f8] sm:$0xff]
    %v203 = vld [vmem:[#allocation5 + $0x400] sm:$0xff]
    %v204 = vld [vmem:[#allocation5 + $0x408] sm:$0xff]
    %v205 = vld [vmem:[#allocation5 + $0x410] sm:$0xff]
    %v206 = vld [vmem:[#allocation5 + $0x418] sm:$0xff]
    %v207 = vld [vmem:[#allocation5 + $0x420] sm:$0xff]
    %v208 = vld [vmem:[#allocation5 + $0x428] sm:$0xff]
    %v209 = vld [vmem:[#allocation5 + $0x430] sm:$0xff]
    %v210 = vld [vmem:[#allocation5 + $0x438] sm:$0xff]
    %v211 = vld [vmem:[#allocation5 + $0x440] sm:$0xff]
    %v212 = vld [vmem:[#allocation5 + $0x448] sm:$0xff]
    %v213 = vld [vmem:[#allocation5 + $0x450] sm:$0xff]
    %v214 = vld [vmem:[#allocation5 + $0x458] sm:$0xff]
    %v215 = vld [vmem:[#allocation5 + $0x460] sm:$0xff]
    %v216 = vld [vmem:[#allocation5 + $0x468] sm:$0xff]
    %v217 = vld [vmem:[#allocation5 + $0x470] sm:$0xff]
    %v218 = vld [vmem:[#allocation5 + $0x478] sm:$0xff]
    %v219 = vld [vmem:[#allocation5 + $0x480] sm:$0xff]
    %v220 = vld [vmem:[#allocation5 + $0x488] sm:$0xff]
    %v221 = vld [vmem:[#allocation5 + $0x490] sm:$0xff]
    %v222 = vld [vmem:[#allocation5 + $0x498] sm:$0xff]
    %v223 = vld [vmem:[#allocation5 + $0x4a0] sm:$0xff]
    %v224 = vld [vmem:[#allocation5 + $0x4a8] sm:$0xff]
    %v225 = vld [vmem:[#allocation5 + $0x4b0] sm:$0xff]
    %v226 = vld [vmem:[#allocation5 + $0x4b8] sm:$0xff]
    %v227 = vld [vmem:[#allocation5 + $0x4c0] sm:$0xff]
    %v228 = vld [vmem:[#allocation5 + $0x4c8] sm:$0xff]
    %v229 = vld [vmem:[#allocation5 + $0x4d0] sm:$0xff]
    %v230 = vld [vmem:[#allocation5 + $0x4d8] sm:$0xff]
    %v231 = vld [vmem:[#allocation5 + $0x4e0] sm:$0xff]
    %v232 = vld [vmem:[#allocation5 + $0x4e8] sm:$0xff]
    %v233 = vld [vmem:[#allocation5 + $0x4f0] sm:$0xff]
    %v234 = vld [vmem:[#allocation5 + $0x4f8] sm:$0xff]
    %v235 = vld [vmem:[#allocation5 + $0x500] sm:$0xff]
    %v236 = vld [vmem:[#allocation5 + $0x508] sm:$0xff]
    %v237 = vld [vmem:[#allocation5 + $0x510] sm:$0xff]
    %v238 = vld [vmem:[#allocation5 + $0x518] sm:$0xff]
    %v239 = vld [vmem:[#allocation5 + $0x520] sm:$0xff]
    %v240 = vld [vmem:[#allocation5 + $0x528] sm:$0xff]
    %v241 = vld [vmem:[#allocation5 + $0x530] sm:$0xff]
    %v242 = vld [vmem:[#allocation5 + $0x538] sm:$0xff]
    %v243 = vld [vmem:[#allocation5 + $0x540] sm:$0xff]
    %v244 = vld [vmem:[#allocation5 + $0x548] sm:$0xff]
    %v245 = vld [vmem:[#allocation5 + $0x550] sm:$0xff]
    %v246 = vld [vmem:[#allocation5 + $0x558] sm:$0xff]
    %v247 = vld [vmem:[#allocation5 + $0x560] sm:$0xff]
    %v248 = vld [vmem:[#allocation5 + $0x568] sm:$0xff]
    %v249 = vld [vmem:[#allocation5 + $0x570] sm:$0xff]
    %v250 = vld [vmem:[#allocation5 + $0x578] sm:$0xff]
    %v251 = vld [vmem:[#allocation5 + $0x580] sm:$0xff]
    %v252 = vld [vmem:[#allocation5 + $0x588] sm:$0xff]
    %v253 = vld [vmem:[#allocation5 + $0x590] sm:$0xff]
    %v254 = vld [vmem:[#allocation5 + $0x598] sm:$0xff]
    %v255 = vld [vmem:[#allocation5 + $0x5a0] sm:$0xff]
    %v256 = vld [vmem:[#allocation5 + $0x5a8] sm:$0xff]
    %v257 = vld [vmem:[#allocation5 + $0x5b0] sm:$0xff]
    %v258 = vld [vmem:[#allocation5 + $0x5b8] sm:$0xff]
    %v259 = vld [vmem:[#allocation5 + $0x5c0] sm:$0xff]
    %v260 = vld [vmem:[#allocation5 + $0x5c8] sm:$0xff]
    %v261 = vld [vmem:[#allocation5 + $0x5d0] sm:$0xff]
    %v262 = vld [vmem:[#allocation5 + $0x5d8] sm:$0xff]
    %v263 = vld [vmem:[#allocation5 + $0x5e0] sm:$0xff]
    %v264 = vld [vmem:[#allocation5 + $0x5e8] sm:$0xff]
    %v265 = vld [vmem:[#allocation5 + $0x5f0] sm:$0xff]
    %v266 = vld [vmem:[#allocation5 + $0x5f8] sm:$0xff]
    %v267 = vld [vmem:[%s2] sm:$0x3f]
    %v269 = vlaneseq
    %v270 = vshrl.u32 %v269, 7
    %v271 = vsub.s32 0, %v270
    %v272 = vrot.slane %v267, %v271
    %v273 = vlaneseq
    %v274 = vshrl.u32 %v273, 7
    %v275 = vsub.s32 1, %v274
    %v276 = vrot.slane %v267, %v275
    %v277 = vlaneseq
    %v278 = vshrl.u32 %v277, 7
    %v279 = vsub.s32 2, %v278
    %v280 = vrot.slane %v267, %v279
    %v281 = vlaneseq
    %v282 = vshrl.u32 %v281, 7
    %v283 = vsub.s32 3, %v282
    %v284 = vrot.slane %v267, %v283
    %v285 = vlaneseq
    %v286 = vshrl.u32 %v285, 7
    %v287 = vsub.s32 4, %v286
    %v288 = vrot.slane %v267, %v287
    %v289 = vlaneseq
    %v290 = vshrl.u32 %v289, 7
    %v291 = vsub.s32 5, %v290
    %v292 = vrot.slane %v267, %v291
    %299 = vmatprep.subr.mxu0 %v76
    %300 = vmatpush1.msra.mxu0 %v75
    %301 = vmatprep.subr.mxu0 %v82
    %302 = vmatpush1.msra.mxu0 %v81
    %303 = vmatprep.subr.mxu0 %v88
    %304 = vmatpush1.msra.mxu0 %v87
    %305 = vmatprep.subr.mxu0 %v94
    %306 = vmatpush1.msra.mxu0 %v93
    %307 = vmatprep.subr.mxu0 %v100
    %308 = vmatpush1.msra.mxu0 %v99
    %309 = vmatprep.subr.mxu0 %v106
    %310 = vmatpush1.msra.mxu0 %v105
    %311 = vmatprep.subr.mxu0 %v112
    %312 = vmatpush1.msra.mxu0 %v111
    %313 = vmatprep.subr.mxu0 %v118
    %314 = vmatpush1.msra.mxu0 %v117
    %315 = vmatprep.subr.mxu0 %v124
    %316 = vmatpush1.msra.mxu0 %v123
    %317 = vmatprep.subr.mxu0 %v130
    %318 = vmatpush1.msra.mxu0 %v129
    %319 = vmatprep.subr.mxu0 %v136
    %320 = vmatpush1.msra.mxu0 %v135
    %321 = vmatprep.subr.mxu0 %v142
    %322 = vmatpush1.msra.mxu0 %v141
    %323 = vmatprep.subr.mxu0 %v148
    %324 = vmatpush1.msra.mxu0 %v147
    %325 = vmatprep.subr.mxu0 %v154
    %326 = vmatpush1.msra.mxu0 %v153
    %327 = vmatprep.subr.mxu0 %v160
    %328 = vmatpush1.msra.mxu0 %v159
    %329 = vmatprep.subr.mxu0 %v166
    %330 = vmatpush1.msra.mxu0 %v165
    %331 = vmatprep.subr.mxu0 %v172
    %332 = vmatpush1.msra.mxu0 %v171
    %333 = vmatprep.subr.mxu0 %v178
    %334 = vmatpush1.msra.mxu0 %v177
    %335 = vmatprep.subr.mxu0 %v184
    %336 = vmatpush1.msra.mxu0 %v183
    %337 = vmatprep.subr.mxu0 %v190
    %338 = vmatpush1.msra.mxu0 %v189
    %339 = vmatprep.subr.mxu0 %v196
    %340 = vmatpush1.msra.mxu0 %v195
    %341 = vmatprep.subr.mxu0 %v202
    %342 = vmatpush1.msra.mxu0 %v201
    %343 = vmatprep.subr.mxu0 %v208
    %344 = vmatpush1.msra.mxu0 %v207
    %345 = vmatprep.subr.mxu0 %v214
    %346 = vmatpush1.msra.mxu0 %v213
    %347 = vmatprep.subr.mxu0 %v220
    %348 = vmatpush1.msra.mxu0 %v219
    %349 = vmatprep.subr.mxu0 %v226
    %350 = vmatpush1.msra.mxu0 %v225
    %351 = vmatprep.subr.mxu0 %v232
    %352 = vmatpush1.msra.mxu0 %v231
    %353 = vmatprep.subr.mxu0 %v238
    %354 = vmatpush1.msra.mxu0 %v237
    %355 = vmatprep.subr.mxu0 %v244
    %356 = vmatpush1.msra.mxu0 %v243
    %357 = vmatprep.subr.mxu0 %v250
    %358 = vmatpush1.msra.mxu0 %v249
    %359 = vmatprep.subr.mxu0 %v256
    %360 = vmatpush1.msra.mxu0 %v255
    %361 = vmatprep.subr.mxu0 %v262
    %362 = vmatpush1.msra.mxu0 %v261
    %363 = vmatprep.mubr.f32.mxu0 %v44
    %364 = vmatmul.mubr.f32.gmra.mrb[0].mxu0 %v43
    %v365 = vpop.f32.mrb[0].mxu0
    %v366 = vadd.f32 %v272, %v365
    %v367 = vpop.f32.mrb[0].mxu0
    %v368 = vadd.f32 %v276, %v367
    %369 = vmatprep.mubr.f32.mxu0 %v46
    %370 = vmatmul.mubr.f32.gmra.mrb[0].mxu0 %v45
    %v371 = vpop.f32.mrb[0].mxu0
    %v372 = vadd.f32 %v272, %v371
    %v373 = vpop.f32.mrb[0].mxu0
    %v374 = vadd.f32 %v276, %v373
    %375 = vmatprep.mubr.f32.mxu0 %v48
    %376 = vmatmul.mubr.f32.gmra.mrb[0].mxu0 %v47
    %v377 = vpop.f32.mrb[0].mxu0
    %v378 = vadd.f32 %v272, %v377
    %v379 = vpop.f32.mrb[0].mxu0
    %v380 = vadd.f32 %v276, %v379
    %381 = vmatprep.mubr.f32.mxu0 %v50
    %382 = vmatmul.mubr.f32.gmra.mrb[0].mxu0 %v49
    %v383 = vpop.f32.mrb[0].mxu0
    %v384 = vadd.f32 %v272, %v383
    %v385 = vpop.f32.mrb[0].mxu0
    %v386 = vadd.f32 %v276, %v385
    %387 = vmatprep.mubr.f32.mxu0 %v52
    %388 = vmatmul.mubr.f32.gmra.mrb[0].mxu0 %v51
    %v389 = vpop.f32.mrb[0].mxu0
    %v390 = vadd.f32 %v272, %v389
    %v391 = vpop.f32.mrb[0].mxu0
    %v392 = vadd.f32 %v276, %v391
    %393 = vmatprep.mubr.f32.mxu0 %v54
    %394 = vmatmul.mubr.f32.gmra.mrb[0].mxu0 %v53
    %v395 = vpop.f32.mrb[0].mxu0
    %v396 = vadd.f32 %v272, %v395
    %v397 = vpop.f32.mrb[0].mxu0
    %v398 = vadd.f32 %v276, %v397
    %399 = vmatprep.mubr.f32.mxu0 %v56
    %400 = vmatmul.mubr.f32.gmra.mrb[0].mxu0 %v55
    %v401 = vpop.f32.mrb[0].mxu0
    %v402 = vadd.f32 %v272, %v401
    %v403 = vpop.f32.mrb[0].mxu0
    %v404 = vadd.f32 %v276, %v403
    %405 = vmatprep.mubr.f32.mxu0 %v58
    %406 = vmatmul.mubr.f32.gmra.mrb[0].mxu0 %v57
    %v407 = vpop.f32.mrb[0].mxu0
    %v408 = vadd.f32 %v272, %v407
    %v409 = vpop.f32.mrb[0].mxu0
    %v410 = vadd.f32 %v276, %v409
    %411 = vmatprep.mubr.f32.mxu0 %v60
    %412 = vmatmul.mubr.f32.gmra.mrb[0].mxu0 %v59
    %v413 = vpop.f32.mrb[0].mxu0
    %v414 = vadd.f32 %v272, %v413
    %v415 = vpop.f32.mrb[0].mxu0
    %v416 = vadd.f32 %v276, %v415
    %417 = vmatprep.mubr.f32.mxu0 %v62
    %418 = vmatmul.mubr.f32.gmra.mrb[0].mxu0 %v61
    %v419 = vpop.f32.mrb[0].mxu0
    %v420 = vadd.f32 %v272, %v419
    %v421 = vpop.f32.mrb[0].mxu0
    %v422 = vadd.f32 %v276, %v421
    %423 = vmatprep.mubr.f32.mxu0 %v64
    %424 = vmatmul.mubr.f32.gmra.mrb[0].mxu0 %v63
    %v425 = vpop.f32.mrb[0].mxu0
    %v426 = vadd.f32 %v272, %v425
    %v427 = vpop.f32.mrb[0].mxu0
    %v428 = vadd.f32 %v276, %v427
    %429 = vmatprep.mubr.f32.mxu0 %v66
    %430 = vmatmul.mubr.f32.gmra.mrb[0].mxu0 %v65
    %v431 = vpop.f32.mrb[0].mxu0
    %v432 = vadd.f32 %v272, %v431
    %v433 = vpop.f32.mrb[0].mxu0
    %v434 = vadd.f32 %v276, %v433
    %435 = vmatprep.mubr.f32.mxu0 %v68
    %436 = vmatmul.mubr.f32.gmra.mrb[0].mxu0 %v67
    %v437 = vpop.f32.mrb[0].mxu0
    %v438 = vadd.f32 %v272, %v437
    %v439 = vpop.f32.mrb[0].mxu0
    %v440 = vadd.f32 %v276, %v439
    %441 = vmatprep.mubr.f32.mxu0 %v70
    %442 = vmatmul.mubr.f32.gmra.mrb[0].mxu0 %v69
    %v443 = vpop.f32.mrb[0].mxu0
    %v444 = vadd.f32 %v272, %v443
    %v445 = vpop.f32.mrb[0].mxu0
    %v446 = vadd.f32 %v276, %v445
    %447 = vmatprep.mubr.f32.mxu0 %v72
    %448 = vmatmul.mubr.f32.gmra.mrb[0].mxu0 %v71
    %v449 = vpop.f32.mrb[0].mxu0
    %v450 = vadd.f32 %v272, %v449
    %v451 = vpop.f32.mrb[0].mxu0
    %v452 = vadd.f32 %v276, %v451
    %453 = vmatprep.mubr.f32.mxu0 %v74
    %454 = vmatmul.mubr.f32.gmra.mrb[0].mxu0 %v73
    %v455 = vpop.f32.mrb[0].mxu0
    %v456 = vadd.f32 %v272, %v455
    %v457 = vpop.f32.mrb[0].mxu0
    %v458 = vadd.f32 %v276, %v457
    %459 = vdwg.mxu0
    %460 = vmatprep.subr.mxu0 %v78
    %461 = vmatpush1.msra.mxu0 %v77
    %462 = vmatprep.subr.mxu0 %v84
    %463 = vmatpush1.msra.mxu0 %v83
    %464 = vmatprep.subr.mxu0 %v90
    %465 = vmatpush1.msra.mxu0 %v89
    %466 = vmatprep.subr.mxu0 %v96
    %467 = vmatpush1.msra.mxu0 %v95
    %468 = vmatprep.subr.mxu0 %v102
    %469 = vmatpush1.msra.mxu0 %v101
    %470 = vmatprep.subr.mxu0 %v108
    %471 = vmatpush1.msra.mxu0 %v107
    %472 = vmatprep.subr.mxu0 %v114
    %473 = vmatpush1.msra.mxu0 %v113
    %474 = vmatprep.subr.mxu0 %v120
    %475 = vmatpush1.msra.mxu0 %v119
    %476 = vmatprep.subr.mxu0 %v126
    %477 = vmatpush1.msra.mxu0 %v125
    %478 = vmatprep.subr.mxu0 %v132
    %479 = vmatpush1.msra.mxu0 %v131
    %480 = vmatprep.subr.mxu0 %v138
    %481 = vmatpush1.msra.mxu0 %v137
    %482 = vmatprep.subr.mxu0 %v144
    %483 = vmatpush1.msra.mxu0 %v143
    %484 = vmatprep.subr.mxu0 %v150
    %485 = vmatpush1.msra.mxu0 %v149
    %486 = vmatprep.subr.mxu0 %v156
    %487 = vmatpush1.msra.mxu0 %v155
    %488 = vmatprep.subr.mxu0 %v162
    %489 = vmatpush1.msra.mxu0 %v161
    %490 = vmatprep.subr.mxu0 %v168
    %491 = vmatpush1.msra.mxu0 %v167
    %492 = vmatprep.subr.mxu0 %v174
    %493 = vmatpush1.msra.mxu0 %v173
    %494 = vmatprep.subr.mxu0 %v180
    %495 = vmatpush1.msra.mxu0 %v179
    %496 = vmatprep.subr.mxu0 %v186
    %497 = vmatpush1.msra.mxu0 %v185
    %498 = vmatprep.subr.mxu0 %v192
    %499 = vmatpush1.msra.mxu0 %v191
    %500 = vmatprep.subr.mxu0 %v198
    %501 = vmatpush1.msra.mxu0 %v197
    %502 = vmatprep.subr.mxu0 %v204
    %503 = vmatpush1.msra.mxu0 %v203
    %504 = vmatprep.subr.mxu0 %v210
    %505 = vmatpush1.msra.mxu0 %v209
    %506 = vmatprep.subr.mxu0 %v216
    %507 = vmatpush1.msra.mxu0 %v215
    %508 = vmatprep.subr.mxu0 %v222
    %509 = vmatpush1.msra.mxu0 %v221
    %510 = vmatprep.subr.mxu0 %v228
    %511 = vmatpush1.msra.mxu0 %v227
    %512 = vmatprep.subr.mxu0 %v234
    %513 = vmatpush1.msra.mxu0 %v233
    %514 = vmatprep.subr.mxu0 %v240
    %515 = vmatpush1.msra.mxu0 %v239
    %516 = vmatprep.subr.mxu0 %v246
    %517 = vmatpush1.msra.mxu0 %v245
    %518 = vmatprep.subr.mxu0 %v252
    %519 = vmatpush1.msra.mxu0 %v251
    %520 = vmatprep.subr.mxu0 %v258
    %521 = vmatpush1.msra.mxu0 %v257
    %522 = vmatprep.subr.mxu0 %v264
    %523 = vmatpush1.msra.mxu0 %v263
    %524 = vmatprep.mubr.f32.mxu0 %v44
    %525 = vmatmul.mubr.f32.gmra.mrb[0].mxu0 %v43
    %v526 = vpop.f32.mrb[0].mxu0
    %v527 = vadd.f32 %v280, %v526
    %v528 = vpop.f32.mrb[0].mxu0
    %v529 = vadd.f32 %v284, %v528
    %530 = vmatprep.mubr.f32.mxu0 %v46
    %531 = vmatmul.mubr.f32.gmra.mrb[0].mxu0 %v45
    %v532 = vpop.f32.mrb[0].mxu0
    %v533 = vadd.f32 %v280, %v532
    %v534 = vpop.f32.mrb[0].mxu0
    %v535 = vadd.f32 %v284, %v534
    %536 = vmatprep.mubr.f32.mxu0 %v48
    %537 = vmatmul.mubr.f32.gmra.mrb[0].mxu0 %v47
    %v538 = vpop.f32.mrb[0].mxu0
    %v539 = vadd.f32 %v280, %v538
    %v540 = vpop.f32.mrb[0].mxu0
    %v541 = vadd.f32 %v284, %v540
    %542 = vmatprep.mubr.f32.mxu0 %v50
    %543 = vmatmul.mubr.f32.gmra.mrb[0].mxu0 %v49
    %v544 = vpop.f32.mrb[0].mxu0
    %v545 = vadd.f32 %v280, %v544
    %v546 = vpop.f32.mrb[0].mxu0
    %v547 = vadd.f32 %v284, %v546
    %548 = vmatprep.mubr.f32.mxu0 %v52
    %549 = vmatmul.mubr.f32.gmra.mrb[0].mxu0 %v51
    %v550 = vpop.f32.mrb[0].mxu0
    %v551 = vadd.f32 %v280, %v550
    %v552 = vpop.f32.mrb[0].mxu0
    %v553 = vadd.f32 %v284, %v552
    %554 = vmatprep.mubr.f32.mxu0 %v54
    %555 = vmatmul.mubr.f32.gmra.mrb[0].mxu0 %v53
    %v556 = vpop.f32.mrb[0].mxu0
    %v557 = vadd.f32 %v280, %v556
    %v558 = vpop.f32.mrb[0].mxu0
    %v559 = vadd.f32 %v284, %v558
    %560 = vmatprep.mubr.f32.mxu0 %v56
    %561 = vmatmul.mubr.f32.gmra.mrb[0].mxu0 %v55
    %v562 = vpop.f32.mrb[0].mxu0
    %v563 = vadd.f32 %v280, %v562
    %v564 = vpop.f32.mrb[0].mxu0
    %v565 = vadd.f32 %v284, %v564
    %566 = vmatprep.mubr.f32.mxu0 %v58
    %567 = vmatmul.mubr.f32.gmra.mrb[0].mxu0 %v57
    %v568 = vpop.f32.mrb[0].mxu0
    %v569 = vadd.f32 %v280, %v568
    %v570 = vpop.f32.mrb[0].mxu0
    %v571 = vadd.f32 %v284, %v570
    %572 = vmatprep.mubr.f32.mxu0 %v60
    %573 = vmatmul.mubr.f32.gmra.mrb[0].mxu0 %v59
    %v574 = vpop.f32.mrb[0].mxu0
    %v575 = vadd.f32 %v280, %v574
    %v576 = vpop.f32.mrb[0].mxu0
    %v577 = vadd.f32 %v284, %v576
    %578 = vmatprep.mubr.f32.mxu0 %v62
    %579 = vmatmul.mubr.f32.gmra.mrb[0].mxu0 %v61
    %v580 = vpop.f32.mrb[0].mxu0
    %v581 = vadd.f32 %v280, %v580
    %v582 = vpop.f32.mrb[0].mxu0
    %v583 = vadd.f32 %v284, %v582
    %584 = vmatprep.mubr.f32.mxu0 %v64
    %585 = vmatmul.mubr.f32.gmra.mrb[0].mxu0 %v63
    %v586 = vpop.f32.mrb[0].mxu0
    %v587 = vadd.f32 %v280, %v586
    %v588 = vpop.f32.mrb[0].mxu0
    %v589 = vadd.f32 %v284, %v588
    %590 = vmatprep.mubr.f32.mxu0 %v66
    %591 = vmatmul.mubr.f32.gmra.mrb[0].mxu0 %v65
    %v592 = vpop.f32.mrb[0].mxu0
    %v593 = vadd.f32 %v280, %v592
    %v594 = vpop.f32.mrb[0].mxu0
    %v595 = vadd.f32 %v284, %v594
    %596 = vmatprep.mubr.f32.mxu0 %v68
    %597 = vmatmul.mubr.f32.gmra.mrb[0].mxu0 %v67
    %v598 = vpop.f32.mrb[0].mxu0
    %v599 = vadd.f32 %v280, %v598
    %v600 = vpop.f32.mrb[0].mxu0
    %v601 = vadd.f32 %v284, %v600
    %602 = vmatprep.mubr.f32.mxu0 %v70
    %603 = vmatmul.mubr.f32.gmra.mrb[0].mxu0 %v69
    %v604 = vpop.f32.mrb[0].mxu0
    %v605 = vadd.f32 %v280, %v604
    %v606 = vpop.f32.mrb[0].mxu0
    %v607 = vadd.f32 %v284, %v606
    %608 = vmatprep.mubr.f32.mxu0 %v72
    %609 = vmatmul.mubr.f32.gmra.mrb[0].mxu0 %v71
    %v610 = vpop.f32.mrb[0].mxu0
    %v611 = vadd.f32 %v280, %v610
    %v612 = vpop.f32.mrb[0].mxu0
    %v613 = vadd.f32 %v284, %v612
    %614 = vmatprep.mubr.f32.mxu0 %v74
    %615 = vmatmul.mubr.f32.gmra.mrb[0].mxu0 %v73
    %v616 = vpop.f32.mrb[0].mxu0
    %v617 = vadd.f32 %v280, %v616
    %v618 = vpop.f32.mrb[0].mxu0
    %v619 = vadd.f32 %v284, %v618
    %620 = vdwg.mxu0
    %621 = vmatprep.subr.mxu0 %v80
    %622 = vmatpush1.msra.mxu0 %v79
    %623 = vmatprep.subr.mxu0 %v86
    %624 = vmatpush1.msra.mxu0 %v85
    %625 = vmatprep.subr.mxu0 %v92
    %626 = vmatpush1.msra.mxu0 %v91
    %627 = vmatprep.subr.mxu0 %v98
    %628 = vmatpush1.msra.mxu0 %v97
    %629 = vmatprep.subr.mxu0 %v104
    %630 = vmatpush1.msra.mxu0 %v103
    %631 = vmatprep.subr.mxu0 %v110
    %632 = vmatpush1.msra.mxu0 %v109
    %633 = vmatprep.subr.mxu0 %v116
    %634 = vmatpush1.msra.mxu0 %v115
    %635 = vmatprep.subr.mxu0 %v122
    %636 = vmatpush1.msra.mxu0 %v121
    %637 = vmatprep.subr.mxu0 %v128
    %638 = vmatpush1.msra.mxu0 %v127
    %639 = vmatprep.subr.mxu0 %v134
    %640 = vmatpush1.msra.mxu0 %v133
    %641 = vmatprep.subr.mxu0 %v140
    %642 = vmatpush1.msra.mxu0 %v139
    %643 = vmatprep.subr.mxu0 %v146
    %644 = vmatpush1.msra.mxu0 %v145
    %645 = vmatprep.subr.mxu0 %v152
    %646 = vmatpush1.msra.mxu0 %v151
    %647 = vmatprep.subr.mxu0 %v158
    %648 = vmatpush1.msra.mxu0 %v157
    %649 = vmatprep.subr.mxu0 %v164
    %650 = vmatpush1.msra.mxu0 %v163
    %651 = vmatprep.subr.mxu0 %v170
    %652 = vmatpush1.msra.mxu0 %v169
    %653 = vmatprep.subr.mxu0 %v176
    %654 = vmatpush1.msra.mxu0 %v175
    %655 = vmatprep.subr.mxu0 %v182
    %656 = vmatpush1.msra.mxu0 %v181
    %657 = vmatprep.subr.mxu0 %v188
    %658 = vmatpush1.msra.mxu0 %v187
    %659 = vmatprep.subr.mxu0 %v194
    %660 = vmatpush1.msra.mxu0 %v193
    %661 = vmatprep.subr.mxu0 %v200
    %662 = vmatpush1.msra.mxu0 %v199
    %663 = vmatprep.subr.mxu0 %v206
    %664 = vmatpush1.msra.mxu0 %v205
    %665 = vmatprep.subr.mxu0 %v212
    %666 = vmatpush1.msra.mxu0 %v211
    %667 = vmatprep.subr.mxu0 %v218
    %668 = vmatpush1.msra.mxu0 %v217
    %669 = vmatprep.subr.mxu0 %v224
    %670 = vmatpush1.msra.mxu0 %v223
    %671 = vmatprep.subr.mxu0 %v230
    %672 = vmatpush1.msra.mxu0 %v229
    %673 = vmatprep.subr.mxu0 %v236
    %674 = vmatpush1.msra.mxu0 %v235
    %675 = vmatprep.subr.mxu0 %v242
    %676 = vmatpush1.msra.mxu0 %v241
    %677 = vmatprep.subr.mxu0 %v248
    %678 = vmatpush1.msra.mxu0 %v247
    %679 = vmatprep.subr.mxu0 %v254
    %680 = vmatpush1.msra.mxu0 %v253
    %681 = vmatprep.subr.mxu0 %v260
    %682 = vmatpush1.msra.mxu0 %v259
    %683 = vmatprep.subr.mxu0 %v266
    %684 = vmatpush1.msra.mxu0 %v265
    %685 = vmatprep.mubr.f32.mxu0 %v44
    %686 = vmatmul.mubr.f32.gmra.mrb[0].mxu0 %v43
    %v687 = vpop.f32.mrb[0].mxu0
    %v688 = vadd.f32 %v288, %v687
    %v689 = vpop.f32.mrb[0].mxu0
    %v690 = vadd.f32 %v292, %v689
    %691 = vmatprep.mubr.f32.mxu0 %v46
    %692 = vmatmul.mubr.f32.gmra.mrb[0].mxu0 %v45
    %v693 = vpop.f32.mrb[0].mxu0
    %v694 = vadd.f32 %v288, %v693
    %v695 = vpop.f32.mrb[0].mxu0
    %v696 = vadd.f32 %v292, %v695
    %697 = vmatprep.mubr.f32.mxu0 %v48
    %698 = vmatmul.mubr.f32.gmra.mrb[0].mxu0 %v47
    %v699 = vpop.f32.mrb[0].mxu0
    %v700 = vadd.f32 %v288, %v699
    %v701 = vpop.f32.mrb[0].mxu0
    %v702 = vadd.f32 %v292, %v701
    %703 = vmatprep.mubr.f32.mxu0 %v50
    %704 = vmatmul.mubr.f32.gmra.mrb[0].mxu0 %v49
    %v705 = vpop.f32.mrb[0].mxu0
    %v706 = vadd.f32 %v288, %v705
    %v707 = vpop.f32.mrb[0].mxu0
    %v708 = vadd.f32 %v292, %v707
    %709 = vmatprep.mubr.f32.mxu0 %v52
    %710 = vmatmul.mubr.f32.gmra.mrb[0].mxu0 %v51
    %v711 = vpop.f32.mrb[0].mxu0
    %v712 = vadd.f32 %v288, %v711
    %v713 = vpop.f32.mrb[0].mxu0
    %v714 = vadd.f32 %v292, %v713
    %715 = vmatprep.mubr.f32.mxu0 %v54
    %716 = vmatmul.mubr.f32.gmra.mrb[0].mxu0 %v53
    %v717 = vpop.f32.mrb[0].mxu0
    %v718 = vadd.f32 %v288, %v717
    %v719 = vpop.f32.mrb[0].mxu0
    %v720 = vadd.f32 %v292, %v719
    %721 = vmatprep.mubr.f32.mxu0 %v56
    %722 = vmatmul.mubr.f32.gmra.mrb[0].mxu0 %v55
    %v723 = vpop.f32.mrb[0].mxu0
    %v724 = vadd.f32 %v288, %v723
    %v725 = vpop.f32.mrb[0].mxu0
    %v726 = vadd.f32 %v292, %v725
    %727 = vmatprep.mubr.f32.mxu0 %v58
    %728 = vmatmul.mubr.f32.gmra.mrb[0].mxu0 %v57
    %v729 = vpop.f32.mrb[0].mxu0
    %v730 = vadd.f32 %v288, %v729
    %v731 = vpop.f32.mrb[0].mxu0
    %v732 = vadd.f32 %v292, %v731
    %733 = vmatprep.mubr.f32.mxu0 %v60
    %734 = vmatmul.mubr.f32.gmra.mrb[0].mxu0 %v59
    %v735 = vpop.f32.mrb[0].mxu0
    %v736 = vadd.f32 %v288, %v735
    %v737 = vpop.f32.mrb[0].mxu0
    %v738 = vadd.f32 %v292, %v737
    %739 = vmatprep.mubr.f32.mxu0 %v62
    %740 = vmatmul.mubr.f32.gmra.mrb[0].mxu0 %v61
    %v741 = vpop.f32.mrb[0].mxu0
    %v742 = vadd.f32 %v288, %v741
    %v743 = vpop.f32.mrb[0].mxu0
    %v744 = vadd.f32 %v292, %v743
    %745 = vmatprep.mubr.f32.mxu0 %v64
    %746 = vmatmul.mubr.f32.gmra.mrb[0].mxu0 %v63
    %v747 = vpop.f32.mrb[0].mxu0
    %v748 = vadd.f32 %v288, %v747
    %v749 = vpop.f32.mrb[0].mxu0
    %v750 = vadd.f32 %v292, %v749
    %751 = vmatprep.mubr.f32.mxu0 %v66
    %752 = vmatmul.mubr.f32.gmra.mrb[0].mxu0 %v65
    %v753 = vpop.f32.mrb[0].mxu0
    %v754 = vadd.f32 %v288, %v753
    %v755 = vpop.f32.mrb[0].mxu0
    %v756 = vadd.f32 %v292, %v755
    %757 = vmatprep.mubr.f32.mxu0 %v68
    %758 = vmatmul.mubr.f32.gmra.mrb[0].mxu0 %v67
    %v759 = vpop.f32.mrb[0].mxu0
    %v760 = vadd.f32 %v288, %v759
    %v761 = vpop.f32.mrb[0].mxu0
    %v762 = vadd.f32 %v292, %v761
    %763 = vmatprep.mubr.f32.mxu0 %v70
    %764 = vmatmul.mubr.f32.gmra.mrb[0].mxu0 %v69
    %v765 = vpop.f32.mrb[0].mxu0
    %v766 = vadd.f32 %v288, %v765
    %v767 = vpop.f32.mrb[0].mxu0
    %v768 = vadd.f32 %v292, %v767
    %769 = vmatprep.mubr.f32.mxu0 %v72
    %770 = vmatmul.mubr.f32.gmra.mrb[0].mxu0 %v71
    %v771 = vpop.f32.mrb[0].mxu0
    %v772 = vadd.f32 %v288, %v771
    %v773 = vpop.f32.mrb[0].mxu0
    %v774 = vadd.f32 %v292, %v773
    %775 = vmatprep.mubr.f32.mxu0 %v74
    %776 = vmatmul.mubr.f32.gmra.mrb[0].mxu0 %v73
    %v777 = vpop.f32.mrb[0].mxu0
    %v778 = vadd.f32 %v288, %v777
    %v779 = vpop.f32.mrb[0].mxu0
    %v780 = vadd.f32 %v292, %v779
    %781 = vdwg.mxu0
    %782 = vst [vmem:[#allocation7] sm:$0xff] %v366
    %783 = vst [vmem:[#allocation7 + $0x8] sm:$0xff] %v368
    %784 = vst [vmem:[#allocation7 + $0x10] sm:$0xff] %v527
    %785 = vst [vmem:[#allocation7 + $0x18] sm:$0xff] %v529
    %786 = vst [vmem:[#allocation7 + $0x20] sm:$0xff] %v688
    %787 = vst [vmem:[#allocation7 + $0x28] sm:$0xff] %v690
    %788 = vst [vmem:[#allocation7 + $0x30] sm:$0xff] %v372
    %789 = vst [vmem:[#allocation7 + $0x38] sm:$0xff] %v374
    %790 = vst [vmem:[#allocation7 + $0x40] sm:$0xff] %v533
    %791 = vst [vmem:[#allocation7 + $0x48] sm:$0xff] %v535
    %792 = vst [vmem:[#allocation7 + $0x50] sm:$0xff] %v694
    %793 = vst [vmem:[#allocation7 + $0x58] sm:$0xff] %v696
    %794 = vst [vmem:[#allocation7 + $0x60] sm:$0xff] %v378
    %795 = vst [vmem:[#allocation7 + $0x68] sm:$0xff] %v380
    %796 = vst [vmem:[#allocation7 + $0x70] sm:$0xff] %v539
    %797 = vst [vmem:[#allocation7 + $0x78] sm:$0xff] %v541
    %798 = vst [vmem:[#allocation7 + $0x80] sm:$0xff] %v700
    %799 = vst [vmem:[#allocation7 + $0x88] sm:$0xff] %v702
    %800 = vst [vmem:[#allocation7 + $0x90] sm:$0xff] %v384
    %801 = vst [vmem:[#allocation7 + $0x98] sm:$0xff] %v386
    %802 = vst [vmem:[#allocation7 + $0xa0] sm:$0xff] %v545
    %803 = vst [vmem:[#allocation7 + $0xa8] sm:$0xff] %v547
    %804 = vst [vmem:[#allocation7 + $0xb0] sm:$0xff] %v706
    %805 = vst [vmem:[#allocation7 + $0xb8] sm:$0xff] %v708
    %806 = vst [vmem:[#allocation7 + $0xc0] sm:$0xff] %v390
    %807 = vst [vmem:[#allocation7 + $0xc8] sm:$0xff] %v392
    %808 = vst [vmem:[#allocation7 + $0xd0] sm:$0xff] %v551
    %809 = vst [vmem:[#allocation7 + $0xd8] sm:$0xff] %v553
    %810 = vst [vmem:[#allocation7 + $0xe0] sm:$0xff] %v712
    %811 = vst [vmem:[#allocation7 + $0xe8] sm:$0xff] %v714
    %812 = vst [vmem:[#allocation7 + $0xf0] sm:$0xff] %v396
    %813 = vst [vmem:[#allocation7 + $0xf8] sm:$0xff] %v398
    %814 = vst [vmem:[#allocation7 + $0x100] sm:$0xff] %v557
    %815 = vst [vmem:[#allocation7 + $0x108] sm:$0xff] %v559
    %816 = vst [vmem:[#allocation7 + $0x110] sm:$0xff] %v718
    %817 = vst [vmem:[#allocation7 + $0x118] sm:$0xff] %v720
    %818 = vst [vmem:[#allocation7 + $0x120] sm:$0xff] %v402
    %819 = vst [vmem:[#allocation7 + $0x128] sm:$0xff] %v404
    %820 = vst [vmem:[#allocation7 + $0x130] sm:$0xff] %v563
    %821 = vst [vmem:[#allocation7 + $0x138] sm:$0xff] %v565
    %822 = vst [vmem:[#allocation7 + $0x140] sm:$0xff] %v724
    %823 = vst [vmem:[#allocation7 + $0x148] sm:$0xff] %v726
    %824 = vst [vmem:[#allocation7 + $0x150] sm:$0xff] %v408
    %825 = vst [vmem:[#allocation7 + $0x158] sm:$0xff] %v410
    %826 = vst [vmem:[#allocation7 + $0x160] sm:$0xff] %v569
    %827 = vst [vmem:[#allocation7 + $0x168] sm:$0xff] %v571
    %828 = vst [vmem:[#allocation7 + $0x170] sm:$0xff] %v730
    %829 = vst [vmem:[#allocation7 + $0x178] sm:$0xff] %v732
    %830 = vst [vmem:[#allocation7 + $0x180] sm:$0xff] %v414
    %831 = vst [vmem:[#allocation7 + $0x188] sm:$0xff] %v416
    %832 = vst [vmem:[#allocation7 + $0x190] sm:$0xff] %v575
    %833 = vst [vmem:[#allocation7 + $0x198] sm:$0xff] %v577
    %834 = vst [vmem:[#allocation7 + $0x1a0] sm:$0xff] %v736
    %835 = vst [vmem:[#allocation7 + $0x1a8] sm:$0xff] %v738
    %836 = vst [vmem:[#allocation7 + $0x1b0] sm:$0xff] %v420
    %837 = vst [vmem:[#allocation7 + $0x1b8] sm:$0xff] %v422
    %838 = vst [vmem:[#allocation7 + $0x1c0] sm:$0xff] %v581
    %839 = vst [vmem:[#allocation7 + $0x1c8] sm:$0xff] %v583
    %840 = vst [vmem:[#allocation7 + $0x1d0] sm:$0xff] %v742
    %841 = vst [vmem:[#allocation7 + $0x1d8] sm:$0xff] %v744
    %842 = vst [vmem:[#allocation7 + $0x1e0] sm:$0xff] %v426
    %843 = vst [vmem:[#allocation7 + $0x1e8] sm:$0xff] %v428
    %844 = vst [vmem:[#allocation7 + $0x1f0] sm:$0xff] %v587
    %845 = vst [vmem:[#allocation7 + $0x1f8] sm:$0xff] %v589
    %846 = vst [vmem:[#allocation7 + $0x200] sm:$0xff] %v748
    %847 = vst [vmem:[#allocation7 + $0x208] sm:$0xff] %v750
    %848 = vst [vmem:[#allocation7 + $0x210] sm:$0xff] %v432
    %849 = vst [vmem:[#allocation7 + $0x218] sm:$0xff] %v434
    %850 = vst [vmem:[#allocation7 + $0x220] sm:$0xff] %v593
    %851 = vst [vmem:[#allocation7 + $0x228] sm:$0xff] %v595
    %852 = vst [vmem:[#allocation7 + $0x230] sm:$0xff] %v754
    %853 = vst [vmem:[#allocation7 + $0x238] sm:$0xff] %v756
    %854 = vst [vmem:[#allocation7 + $0x240] sm:$0xff] %v438
    %855 = vst [vmem:[#allocation7 + $0x248] sm:$0xff] %v440
    %856 = vst [vmem:[#allocation7 + $0x250] sm:$0xff] %v599
    %857 = vst [vmem:[#allocation7 + $0x258] sm:$0xff] %v601
    %858 = vst [vmem:[#allocation7 + $0x260] sm:$0xff] %v760
    %859 = vst [vmem:[#allocation7 + $0x268] sm:$0xff] %v762
    %860 = vst [vmem:[#allocation7 + $0x270] sm:$0xff] %v444
    %861 = vst [vmem:[#allocation7 + $0x278] sm:$0xff] %v446
    %862 = vst [vmem:[#allocation7 + $0x280] sm:$0xff] %v605
    %863 = vst [vmem:[#allocation7 + $0x288] sm:$0xff] %v607
    %864 = vst [vmem:[#allocation7 + $0x290] sm:$0xff] %v766
    %865 = vst [vmem:[#allocation7 + $0x298] sm:$0xff] %v768
    %866 = vst [vmem:[#allocation7 + $0x2a0] sm:$0xff] %v450
    %867 = vst [vmem:[#allocation7 + $0x2a8] sm:$0xff] %v452
    %868 = vst [vmem:[#allocation7 + $0x2b0] sm:$0xff] %v611
    %869 = vst [vmem:[#allocation7 + $0x2b8] sm:$0xff] %v613
    %870 = vst [vmem:[#allocation7 + $0x2c0] sm:$0xff] %v772
    %871 = vst [vmem:[#allocation7 + $0x2c8] sm:$0xff] %v774
    %872 = vst [vmem:[#allocation7 + $0x2d0] sm:$0xff] %v456
    %873 = vst [vmem:[#allocation7 + $0x2d8] sm:$0xff] %v458
    %874 = vst [vmem:[#allocation7 + $0x2e0] sm:$0xff] %v617
    %875 = vst [vmem:[#allocation7 + $0x2e8] sm:$0xff] %v619
    %876 = vst [vmem:[#allocation7 + $0x2f0] sm:$0xff] %v778
    %877 = vst [vmem:[#allocation7 + $0x2f8] sm:$0xff] %v780
    // Predicated region
    $region22: #{tpu_custom_call.1} parent=1 // pred_check
      _
    $region23: #{tpu_custom_call.1} parent=1 // pred_check_branch
      %879 = sbr.rel (0) target = $region25
    $region24: #{tpu_custom_call.1} parent=1 // pred_region
      %s881 = ssub.s32 12288, 12288
      %882 = vsyncadd [#allocation4], %s881
      %s883 = sshll.u32 [#allocation7], 4
      %s884 = int_to_ptr.vmem [resolvable:$true] %s883
      %889 = dma.vmem_to_hbm [thread:$0]  %s884, 12288, %s3, [#allocation4], 768, 768, 48
    $region25: #{tpu_custom_call.1} parent=1 // pred_fallthru
      _
    // Predicated region
    $region26: #{tpu_custom_call.1} parent=1 // pred_check
      _
    $region27: #{tpu_custom_call.1} parent=1 // pred_check_branch
      %891 = sbr.rel (0) target = $region29
    $region28: #{tpu_custom_call.1} parent=1 // pred_region
      %892 = dma.done [#allocation4], 12288
    $region29: #{tpu_custom_call.1} parent=1 // pred_fallthru
      _
    %893 = vsyncpa [#allocation3], 1
    %894 = vsyncpa [#allocation6], 1
    %895 = vsyncpa [#allocation4], 1

</llo_original>
